<compile_context>
chip_gen: v7x
topology: tpu7x:2x2x1
jax: 0.10.0
libtpu: 0.0.40
codegen_flags: <defaults>
</compile_context>

<pallas_src>
import jax
import jax.numpy as jnp
from jax.experimental import pallas as pl
from jax.experimental.pallas import tpu as pltpu


def _round_up(x, m):
    return (x + m - 1) // m * m


def _tpu_vmem_capacity_bytes():
    try:
        return int(pltpu.get_tpu_info().vmem_capacity_bytes)
    except Exception:
        return 128 << 20


def _tpu_num_tensorcores():
    """Best-effort TensorCore-per-chip count (1 on v5e/v6e, 2 on v7x-class)."""
    try:
        info = pltpu.get_tpu_info()
        for attr in ("num_tensorcores", "tensorcores_per_chip"):
            v = getattr(info, attr, None)
            if isinstance(v, int) and v > 0:
                return min(v, 4)
        # Heuristic: 64 MiB-per-core VMEM generations are dual-TensorCore.
        if int(getattr(info, "vmem_capacity_bytes", 128 << 20)) <= (64 << 20):
            return 2
    except Exception:
        pass
    return 1


def _vmem_estimate_bytes(tm, dims, out_channels):
    """Rough double-buffered VMEM working-set estimate for tile size tm."""
    byt = 4  # float32
    est = 2 * 2 * tm * dims[0] * byt           # x_i + x_j tiles, 2 bufs each
    est += 2 * out_channels * tm * byt         # output tile, 2 bufs
    for a, b in zip(dims[:-1], dims[1:]):      # weights + biases, 2 bufs each
        est += 2 * (a * b + b) * byt
    est += 3 * tm * max(dims) * byt            # live activation intermediates
    return est


def _link_predictor_kernel(xi_ref, xj_ref, *refs):
    """refs = (w1, b1, ..., w_last_T, b_last_T, o_ref).

    xi_ref/xj_ref are (tile_m, in_ch) blocks; hidden weights are (in, out),
    the last weight is passed pre-transposed as (out_c, hidden) and the last
    bias as (out_c, 1) so the final store is lane-dense.
    """
    params = refs[:-1]
    o_ref = refs[-1]
    n_hidden = len(params) // 2 - 1

    # Hadamard product of the two node embeddings.
    x = xi_ref[...] * xj_ref[...]

    # Hidden layers: Linear -> ReLU -> (dropout = identity in eval mode).
    # TODO(synk): training-mode dropout (stochastic masking) not implemented;
    #             eval-mode forward is exact.
    for l in range(n_hidden):
        w = params[2 * l][...]
        b = params[2 * l + 1][...]
        x = jnp.maximum(jnp.dot(x, w, preferred_element_type=jnp.float32) + b, 0.0)

    # Final layer computed feature-major: (out_c, h) @ (h, tile) -> (out_c, tile)
    # so the sigmoid output is lane-dense (full-width vst, contiguous DMA).
    w_t = params[-2][...]                      # (out_c, hidden)
    b_t = params[-1][...]                      # (out_c, 1)
    logits = jnp.dot(w_t, x.T, preferred_element_type=jnp.float32) + b_t
    o_ref[...] = (1.0 / (1.0 + jnp.exp(-logits)))[None, :, :]


def link_predictor_forward(x_i, x_j, weights, biases, *, tile_m=8192):
    """LinkPredictor forward pass via a single pallas_call.

    x_i, x_j : (N, in_channels) float32
    weights  : list of (in_dim, out_dim) float32 (already transposed vs torch)
    biases   : list of (1, out_dim) float32
    """
    N, in_channels = x_i.shape
    out_channels = weights[-1].shape[1]
    dims = [in_channels] + [w.shape[1] for w in weights]

    vmem_cap = _tpu_vmem_capacity_bytes()
    vmem_budget = vmem_cap // 2
    num_tc = _tpu_num_tensorcores()

    # ---- Tile selection -----------------------------------------------------
    # Biggest lane-aligned (multiple of 128) tile covering the batch.
    tm = _round_up(min(tile_m, max(N, 1)), 128)
    # On multi-TensorCore chips keep >= ~4 grid steps per core so the
    # auto-pipeline always has a next block to prefetch on every core.
    if num_tc > 1 and N > 2 * 1024 * num_tc:
        tm = min(tm, max(1024, _round_up(pl.cdiv(N, 4 * num_tc), 128)))
    # Shrink until the double-buffered working set fits the VMEM budget.
    while tm > 128 and _vmem_estimate_bytes(tm, dims, out_channels) > vmem_budget:
        tm = max(128, _round_up(tm // 2, 128))

    # ---- Grid / padding -----------------------------------------------------
    # General case: no padding; Pallas handles the partial final block.
    # Only when a single tile exceeds the batch do we pad (bounded by one tile).
    if tm > N:
        pad = tm - N
        x_i = jnp.pad(x_i, ((0, pad), (0, 0)))
        x_j = jnp.pad(x_j, ((0, pad), (0, 0)))
        n_rows = tm
    else:
        n_rows = N
    num_blocks = pl.cdiv(n_rows, tm)

    # ---- Parameters (last layer pre-transposed for the lane-dense store) ----
    flat_params = []
    for w, b in zip(weights[:-1], biases[:-1]):
        flat_params += [w, b]
    flat_params += [weights[-1].T, biases[-1].T]   # (out_c, hidden), (out_c, 1)

    x_spec = pl.BlockSpec((tm, in_channels), lambda i: (i, 0))
    in_specs = [x_spec, x_spec]
    for p in flat_params:
        # Constant index_map -> weights/biases stay resident in VMEM.
        in_specs.append(pl.BlockSpec(p.shape, lambda i: (0, 0)))

    out_specs = pl.BlockSpec((1, out_channels, tm), lambda i: (i, 0, 0))

    grid_spec = pltpu.PrefetchScalarGridSpec(
        num_scalar_prefetch=0,
        grid=(num_blocks,),
        in_specs=in_specs,
        out_specs=out_specs,
    )

    est = _vmem_estimate_bytes(tm, dims, out_channels)
    vmem_limit = int(min(max(2 * est, 32 << 20), int(0.75 * vmem_cap)))

    out = pl.pallas_call(
        _link_predictor_kernel,
        out_shape=jax.ShapeDtypeStruct((num_blocks, out_channels, tm), jnp.float32),
        grid_spec=grid_spec,
        compiler_params=pltpu.CompilerParams(
            dimension_semantics=("parallel",),
            vmem_limit_bytes=vmem_limit),
    )(x_i, x_j, *flat_params)

    # Undo the lane-dense layout: (nb, out_c, tm) -> (nb*tm, out_c) -> (N, out_c).
    out = out.transpose(0, 2, 1).reshape(num_blocks * tm, out_channels)
    return out[:N]


def init_link_predictor_params(key, in_channels, hidden_channels,
                               out_channels, num_layers):
    """Deterministic synthetic init matching nn.Linear shapes.

    PyTorch stores weight as (out, in); we build (in, out) directly so the
    kernel computes x @ W + b (== x @ weight.T + bias in torch)."""
    dims = [in_channels] + [hidden_channels] * (num_layers - 1) + [out_channels]
    weights, biases = [], []
    for l in range(num_layers):
        key, kw, kb = jax.random.split(key, 3)
        fan_in = dims[l]
        bound = 1.0 / (fan_in ** 0.5)
        w = jax.random.uniform(kw, (dims[l], dims[l + 1]),
                               minval=-bound, maxval=bound, dtype=jnp.float32)
        b = jax.random.uniform(kb, (1, dims[l + 1]),
                               minval=-bound, maxval=bound, dtype=jnp.float32)
        weights.append(w)
        biases.append(b)
    return weights, biases


def link_predictor_reference(x_i, x_j, weights, biases):
    """Pure-JAX reference for correctness checking."""
    x = x_i * x_j
    for w, b in zip(weights[:-1], biases[:-1]):
        x = jnp.maximum(x @ w + b, 0.0)
    x = x @ weights[-1] + biases[-1]
    return 1.0 / (1.0 + jnp.exp(-x))


if __name__ == "__main__":
    # Shapes implied by the module: LinkPredictor(in=32, hidden=32, out=1,
    # num_layers=3, dropout=0.5).
    in_channels, hidden_channels, out_channels = 32, 32, 1
    num_layers = 3

    key = jax.random.PRNGKey(0)
    key, k_p = jax.random.split(key)
    weights, biases = init_link_predictor_params(
        k_p, in_channels, hidden_channels, out_channels, num_layers)

    # Case 1: tiny batch (single tile, small pad to the 128-row tile).
    # Case 2: non-aligned batch with multi-step grid + partial final block.
    # Case 3: larger no-pad multi-block grid with a partial final block.
    for n, tile in ((16, 8192), (300, 128), (1000, 256)):
        key, k_i, k_j = jax.random.split(key, 3)
        x_i = jax.random.normal(k_i, (n, in_channels), dtype=jnp.float32)
        x_j = jax.random.normal(k_j, (n, in_channels), dtype=jnp.float32)
        out = jax.block_until_ready(
            link_predictor_forward(x_i, x_j, weights, biases, tile_m=tile))
        ref = link_predictor_reference(x_i, x_j, weights, biases)
        assert out.shape == (n, out_channels), (out.shape, n)
        assert jnp.allclose(out, ref, atol=1e-5, rtol=1e-5), f"mismatch N={n}"

    print("KERNEL_OK")
</pallas_src>

<mosaic_0001>
module attributes {stable_mosaic.version = 11 : i64} {
  func.func @_link_predictor_kernel(%arg0: i32, %arg1: memref<128x32xf32, #tpu.memory_space<vmem>>, %arg2: memref<128x32xf32, #tpu.memory_space<vmem>>, %arg3: memref<32x32xf32, #tpu.memory_space<vmem>>, %arg4: memref<1x32xf32, #tpu.memory_space<vmem>>, %arg5: memref<32x32xf32, #tpu.memory_space<vmem>>, %arg6: memref<1x32xf32, #tpu.memory_space<vmem>>, %arg7: memref<1x32xf32, #tpu.memory_space<vmem>>, %arg8: memref<1x1xf32, #tpu.memory_space<vmem>>, %arg9: memref<1x1x128xf32, #tpu.memory_space<vmem>>) attributes {dimension_semantics = [#tpu.dimension_semantics<parallel>], iteration_bounds = array<i64: 1>, scalar_prefetch = 0 : i64, scratch_operands = 0 : i64, tpu.core_type = #tpu.core_type<tc>, window_params = [{transform_indices = @transform_0, window_bounds = array<i64: 128, 32>}, {transform_indices = @transform_1, window_bounds = array<i64: 128, 32>}, {pipeline_mode = #tpu.pipeline_mode<synchronous>, transform_indices = @transform_2, window_bounds = array<i64: 32, 32>}, {pipeline_mode = #tpu.pipeline_mode<synchronous>, transform_indices = @transform_3, window_bounds = array<i64: 1, 32>}, {pipeline_mode = #tpu.pipeline_mode<synchronous>, transform_indices = @transform_4, window_bounds = array<i64: 32, 32>}, {pipeline_mode = #tpu.pipeline_mode<synchronous>, transform_indices = @transform_5, window_bounds = array<i64: 1, 32>}, {pipeline_mode = #tpu.pipeline_mode<synchronous>, transform_indices = @transform_6, window_bounds = array<i64: 1, 32>}, {pipeline_mode = #tpu.pipeline_mode<synchronous>, transform_indices = @transform_7, window_bounds = array<i64: 1, 1>}, {transform_indices = @transform_8, window_bounds = array<i64: 1, 1, 128>}]} {
    %c0 = arith.constant 0 : index
    %c0_0 = arith.constant 0 : index
    %0 = vector.load %arg1[%c0, %c0_0] : memref<128x32xf32, #tpu.memory_space<vmem>>, vector<128x32xf32>
    %c0_1 = arith.constant 0 : index
    %c0_2 = arith.constant 0 : index
    %1 = vector.load %arg2[%c0_1, %c0_2] : memref<128x32xf32, #tpu.memory_space<vmem>>, vector<128x32xf32>
    %2 = arith.mulf %0, %1 : vector<128x32xf32>
    %c0_3 = arith.constant 0 : index
    %c0_4 = arith.constant 0 : index
    %3 = vector.load %arg3[%c0_3, %c0_4] : memref<32x32xf32, #tpu.memory_space<vmem>>, vector<32x32xf32>
    %c0_5 = arith.constant 0 : index
    %c0_6 = arith.constant 0 : index
    %4 = vector.load %arg4[%c0_5, %c0_6] : memref<1x32xf32, #tpu.memory_space<vmem>>, vector<1x32xf32>
    %cst = arith.constant dense<0.000000e+00> : vector<128x32xf32>
    %5 = tpu.matmul %2, %3, %cst {dimension_numbers = #tpu.dot_dimension_numbers<[1], [0], [0], [1], [0, 0, 1, 1], [], []>} : vector<128x32xf32>, vector<32x32xf32>, vector<128x32xf32> -> vector<128x32xf32>
    %6 = vector.broadcast %4 : vector<1x32xf32> to vector<128x32xf32>
    %7 = arith.addf %5, %6 : vector<128x32xf32>
    %cst_7 = arith.constant 0.000000e+00 : f32
    %8 = vector.broadcast %cst_7 : f32 to vector<128x32xf32>
    %9 = arith.maximumf %7, %8 : vector<128x32xf32>
    %c0_8 = arith.constant 0 : index
    %c0_9 = arith.constant 0 : index
    %10 = vector.load %arg5[%c0_8, %c0_9] : memref<32x32xf32, #tpu.memory_space<vmem>>, vector<32x32xf32>
    %c0_10 = arith.constant 0 : index
    %c0_11 = arith.constant 0 : index
    %11 = vector.load %arg6[%c0_10, %c0_11] : memref<1x32xf32, #tpu.memory_space<vmem>>, vector<1x32xf32>
    %cst_12 = arith.constant dense<0.000000e+00> : vector<128x32xf32>
    %12 = tpu.matmul %9, %10, %cst_12 {dimension_numbers = #tpu.dot_dimension_numbers<[1], [0], [0], [1], [0, 0, 1, 1], [], []>} : vector<128x32xf32>, vector<32x32xf32>, vector<128x32xf32> -> vector<128x32xf32>
    %13 = vector.broadcast %11 : vector<1x32xf32> to vector<128x32xf32>
    %14 = arith.addf %12, %13 : vector<128x32xf32>
    %cst_13 = arith.constant 0.000000e+00 : f32
    %15 = vector.broadcast %cst_13 : f32 to vector<128x32xf32>
    %16 = arith.maximumf %14, %15 : vector<128x32xf32>
    %c0_14 = arith.constant 0 : index
    %c0_15 = arith.constant 0 : index
    %17 = vector.load %arg7[%c0_14, %c0_15] : memref<1x32xf32, #tpu.memory_space<vmem>>, vector<1x32xf32>
    %c0_16 = arith.constant 0 : index
    %c0_17 = arith.constant 0 : index
    %18 = vector.load %arg8[%c0_16, %c0_17] : memref<1x1xf32, #tpu.memory_space<vmem>>, vector<1x1xf32>
    %19 = tpu.transpose %16, [1, 0] : vector<128x32xf32> -> vector<32x128xf32>
    %cst_18 = arith.constant dense<0.000000e+00> : vector<1x128xf32>
    %20 = tpu.matmul %17, %19, %cst_18 {dimension_numbers = #tpu.dot_dimension_numbers<[1], [0], [0], [1], [0, 0, 1, 1], [], []>} : vector<1x32xf32>, vector<32x128xf32>, vector<1x128xf32> -> vector<1x128xf32>
    %21 = vector.broadcast %18 : vector<1x1xf32> to vector<1x128xf32>
    %22 = arith.addf %20, %21 : vector<1x128xf32>
    %cst_19 = arith.constant 0.000000e+00 : f32
    %23 = vector.broadcast %cst_19 : f32 to vector<1x128xf32>
    %24 = arith.subf %23, %22 : vector<1x128xf32>
    %25 = math.exp %24 : vector<1x128xf32>
    %cst_20 = arith.constant 1.000000e+00 : f32
    %26 = vector.broadcast %cst_20 : f32 to vector<1x128xf32>
    %27 = arith.addf %26, %25 : vector<1x128xf32>
    %cst_21 = arith.constant 1.000000e+00 : f32
    %28 = vector.broadcast %cst_21 : f32 to vector<1x128xf32>
    %29 = arith.divf %28, %27 : vector<1x128xf32>
    %30 = vector.shape_cast %29 : vector<1x128xf32> to vector<1x1x128xf32>
    %c0_22 = arith.constant 0 : index
    %c0_23 = arith.constant 0 : index
    %c0_24 = arith.constant 0 : index
    %31 = vector.load %arg9[%c0_22, %c0_23, %c0_24] : memref<1x1x128xf32, #tpu.memory_space<vmem>>, vector<1x1x128xf32>
    tpu.vector_store %arg9[%c0_22, %c0_23, %c0_24], %30 {strides = array<i32>} : memref<1x1x128xf32, #tpu.memory_space<vmem>>, vector<1x1x128xf32>,
    return
  }
  func.func @transform_0(%arg0: i32) -> (i32, i32) {
    %c0_i32 = arith.constant 0 : i32
    %c0_i32_0 = arith.constant 0 : i32
    return %arg0, %c0_i32 : i32, i32
  }
  func.func @transform_1(%arg0: i32) -> (i32, i32) {
    %c0_i32 = arith.constant 0 : i32
    %c0_i32_0 = arith.constant 0 : i32
    return %arg0, %c0_i32 : i32, i32
  }
  func.func @transform_2(%arg0: i32) -> (i32, i32) {
    %c0_i32 = arith.constant 0 : i32
    %c0_i32_0 = arith.constant 0 : i32
    %c0_i32_1 = arith.constant 0 : i32
    return %c0_i32, %c0_i32_0 : i32, i32
  }
  func.func @transform_3(%arg0: i32) -> (i32, i32) {
    %c0_i32 = arith.constant 0 : i32
    %c0_i32_0 = arith.constant 0 : i32
    %c0_i32_1 = arith.constant 0 : i32
    return %c0_i32, %c0_i32_0 : i32, i32
  }
  func.func @transform_4(%arg0: i32) -> (i32, i32) {
    %c0_i32 = arith.constant 0 : i32
    %c0_i32_0 = arith.constant 0 : i32
    %c0_i32_1 = arith.constant 0 : i32
    return %c0_i32, %c0_i32_0 : i32, i32
  }
  func.func @transform_5(%arg0: i32) -> (i32, i32) {
    %c0_i32 = arith.constant 0 : i32
    %c0_i32_0 = arith.constant 0 : i32
    %c0_i32_1 = arith.constant 0 : i32
    return %c0_i32, %c0_i32_0 : i32, i32
  }
  func.func @transform_6(%arg0: i32) -> (i32, i32) {
    %c0_i32 = arith.constant 0 : i32
    %c0_i32_0 = arith.constant 0 : i32
    %c0_i32_1 = arith.constant 0 : i32
    return %c0_i32, %c0_i32_0 : i32, i32
  }
  func.func @transform_7(%arg0: i32) -> (i32, i32) {
    %c0_i32 = arith.constant 0 : i32
    %c0_i32_0 = arith.constant 0 : i32
    %c0_i32_1 = arith.constant 0 : i32
    return %c0_i32, %c0_i32_0 : i32, i32
  }
  func.func @transform_8(%arg0: i32) -> (i32, i32, i32) {
    %c0_i32 = arith.constant 0 : i32
    %c0_i32_0 = arith.constant 0 : i32
    %c0_i32_1 = arith.constant 0 : i32
    return %arg0, %c0_i32, %c0_i32_0 : i32, i32, i32
  }
}

</mosaic_0001>

<llo_original>
// kernel: tpu_custom_call.1
$region0: #{tpu_custom_call.1}
  #allocation0 [shape = 'u32[]', space=smem, size = 0x4, offset = 0x4, fixed_abs, tag = 'smem constant byte address 0x4 - core index']
  #allocation1 [shape = 'u32[144,128]{1,0:T(1,128)}', space=vmem, size = 0x12000, scoped, tag = 'internal scratch']
  #allocation2 [shape = 'f32[1,1]{1,0:T(1,128)S(1)}', space=vmem, size = 0x200, scoped, tag = 'scoped memory for tpu_custom_call.1']
  %s0 = inlined_call_operand.vmem [shape: f32[128,32], index: 0, kind: input, shape index: {}]
  %s1 = inlined_call_operand.vmem [shape: f32[128,32], index: 1, kind: input, shape index: {}]
  %s2 = inlined_call_operand.vmem [shape: f32[32,32], index: 2, kind: input, shape index: {}]
  %s3 = inlined_call_operand.vmem [shape: f32[1,32], index: 3, kind: input, shape index: {}]
  %s4 = inlined_call_operand.vmem [shape: f32[32,32], index: 4, kind: input, shape index: {}]
  %s5 = inlined_call_operand.vmem [shape: f32[1,32], index: 5, kind: input, shape index: {}]
  %s6 = inlined_call_operand.vmem [shape: f32[1,32], index: 6, kind: input, shape index: {}]
  %s7 = inlined_call_operand.<no memory space> [shape: f32[1,1], index: 7, kind: input, shape index: {}]
  %s8 = inlined_call_operand.hbm [shape: f32[1,1,128], index: 8, kind: output, shape index: {}]
  %s9 = sld [smem:[#allocation0]]
  $region42: #{tpu_custom_call.1} parent=0
    _
  %s11 = ssub.s32 1, %s9
  %s12 = scalar_select 0, %s11, %s9
  %v13 = vstv %s7
  %14 = vst [vmem:[#allocation2] sm:$0x1] %v13
  $region1: #{tpu_custom_call.1} parent=0
    #allocation3 [shape = 'u8[512]{0}', space=vmem, size = 0x400, scoped, tag = 'output window, operand 0, single buffered']
    #allocation4 [shape = 's32[1]{0}', space=sflag, size = 0x4, scoped, tag = 'scoped memory for tpu_custom_call.1']
    %15 = vsyncpa [#allocation4], 0
    // Predicated region
    $region2: #{tpu_custom_call.1} parent=1 // pred_check
      _
    $region3: #{tpu_custom_call.1} parent=1 // pred_check_branch
      %17 = sbr.rel (0) target = $region5
    $region4: #{tpu_custom_call.1} parent=1 // pred_region
      _
    $region5: #{tpu_custom_call.1} parent=1 // pred_fallthru
      _
    // Predicated region
    $region6: #{tpu_custom_call.1} parent=1 // pred_check
      _
    $region7: #{tpu_custom_call.1} parent=1 // pred_check_branch
      %19 = sbr.rel (0) target = $region9
    $region8: #{tpu_custom_call.1} parent=1 // pred_region
      _
    $region9: #{tpu_custom_call.1} parent=1 // pred_fallthru
      _
    // Predicated region
    $region10: #{tpu_custom_call.1} parent=1 // pred_check
      _
    $region11: #{tpu_custom_call.1} parent=1 // pred_check_branch
      %21 = sbr.rel (0) target = $region13
    $region12: #{tpu_custom_call.1} parent=1 // pred_region
      _
    $region13: #{tpu_custom_call.1} parent=1 // pred_fallthru
      _
    // Predicated region
    $region14: #{tpu_custom_call.1} parent=1 // pred_check
      _
    $region15: #{tpu_custom_call.1} parent=1 // pred_check_branch
      %23 = sbr.rel (0) target = $region17
    $region16: #{tpu_custom_call.1} parent=1 // pred_region
      _
    $region17: #{tpu_custom_call.1} parent=1 // pred_fallthru
      _
    // Predicated region
    $region18: #{tpu_custom_call.1} parent=1 // pred_check
      _
    $region19: #{tpu_custom_call.1} parent=1 // pred_check_branch
      %25 = sbr.rel (0) target = $region21
    $region20: #{tpu_custom_call.1} parent=1 // pred_region
      _
    $region21: #{tpu_custom_call.1} parent=1 // pred_fallthru
      _
    // Predicated region
    $region22: #{tpu_custom_call.1} parent=1 // pred_check
      _
    $region23: #{tpu_custom_call.1} parent=1 // pred_check_branch
      %27 = sbr.rel (0) target = $region25
    $region24: #{tpu_custom_call.1} parent=1 // pred_region
      _
    $region25: #{tpu_custom_call.1} parent=1 // pred_fallthru
      _
    // Predicated region
    $region26: #{tpu_custom_call.1} parent=1 // pred_check
      _
    $region27: #{tpu_custom_call.1} parent=1 // pred_check_branch
      %29 = sbr.rel (0) target = $region29
    $region28: #{tpu_custom_call.1} parent=1 // pred_region
      _
    $region29: #{tpu_custom_call.1} parent=1 // pred_fallthru
      _
    // Predicated region
    $region30: #{tpu_custom_call.1} parent=1 // pred_check
      _
    $region31: #{tpu_custom_call.1} parent=1 // pred_check_branch
      %31 = sbr.rel (0) target = $region33
    $region32: #{tpu_custom_call.1} parent=1 // pred_region
      _
    $region33: #{tpu_custom_call.1} parent=1 // pred_fallthru
      _
    %v32 = vld [vmem:[%s0] sm:$0xff]
    %v33 = vld [vmem:[%s0 + $0x8] sm:$0xff]
    %v34 = vld [vmem:[%s0 + $0x10] sm:$0xff]
    %v35 = vld [vmem:[%s0 + $0x18] sm:$0xff]
    %v36 = vld [vmem:[%s0 + $0x20] sm:$0xff]
    %v37 = vld [vmem:[%s0 + $0x28] sm:$0xff]
    %v38 = vld [vmem:[%s0 + $0x30] sm:$0xff]
    %v39 = vld [vmem:[%s0 + $0x38] sm:$0xff]
    %v40 = vld [vmem:[%s0 + $0x40] sm:$0xff]
    %v41 = vld [vmem:[%s0 + $0x48] sm:$0xff]
    %v42 = vld [vmem:[%s0 + $0x50] sm:$0xff]
    %v43 = vld [vmem:[%s0 + $0x58] sm:$0xff]
    %v44 = vld [vmem:[%s0 + $0x60] sm:$0xff]
    %v45 = vld [vmem:[%s0 + $0x68] sm:$0xff]
    %v46 = vld [vmem:[%s0 + $0x70] sm:$0xff]
    %v47 = vld [vmem:[%s0 + $0x78] sm:$0xff]
    %v48 = vld [vmem:[%s1] sm:$0xff]
    %v49 = vld [vmem:[%s1 + $0x8] sm:$0xff]
    %v50 = vld [vmem:[%s1 + $0x10] sm:$0xff]
    %v51 = vld [vmem:[%s1 + $0x18] sm:$0xff]
    %v52 = vld [vmem:[%s1 + $0x20] sm:$0xff]
    %v53 = vld [vmem:[%s1 + $0x28] sm:$0xff]
    %v54 = vld [vmem:[%s1 + $0x30] sm:$0xff]
    %v55 = vld [vmem:[%s1 + $0x38] sm:$0xff]
    %v56 = vld [vmem:[%s1 + $0x40] sm:$0xff]
    %v57 = vld [vmem:[%s1 + $0x48] sm:$0xff]
    %v58 = vld [vmem:[%s1 + $0x50] sm:$0xff]
    %v59 = vld [vmem:[%s1 + $0x58] sm:$0xff]
    %v60 = vld [vmem:[%s1 + $0x60] sm:$0xff]
    %v61 = vld [vmem:[%s1 + $0x68] sm:$0xff]
    %v62 = vld [vmem:[%s1 + $0x70] sm:$0xff]
    %v63 = vld [vmem:[%s1 + $0x78] sm:$0xff]
    %v64 = vmul.f32 %v32, %v48
    %v65 = vmul.f32 %v33, %v49
    %v66 = vmul.f32 %v34, %v50
    %v67 = vmul.f32 %v35, %v51
    %v68 = vmul.f32 %v36, %v52
    %v69 = vmul.f32 %v37, %v53
    %v70 = vmul.f32 %v38, %v54
    %v71 = vmul.f32 %v39, %v55
    %v72 = vmul.f32 %v40, %v56
    %v73 = vmul.f32 %v41, %v57
    %v74 = vmul.f32 %v42, %v58
    %v75 = vmul.f32 %v43, %v59
    %v76 = vmul.f32 %v44, %v60
    %v77 = vmul.f32 %v45, %v61
    %v78 = vmul.f32 %v46, %v62
    %v79 = vmul.f32 %v47, %v63
    %v80 = vld [vmem:[%s2] sm:$0xff]
    %v81 = vld [vmem:[%s2 + $0x8] sm:$0xff]
    %v82 = vld [vmem:[%s2 + $0x10] sm:$0xff]
    %v83 = vld [vmem:[%s2 + $0x18] sm:$0xff]
    %v84 = vld [vmem:[%s3] sm:$0x1]
    %v86 = vlaneseq
    %v87 = vshrl.u32 %v86, 7
    %v88 = vsub.s32 0, %v87
    %v89 = vrot.slane %v84, %v88
    %vm91 = vcmask 261120
    %v93 = vsel %vm91, %v64, 0
    %v96 = vsel %vm91, %v65, 0
    %v99 = vsel %vm91, %v66, 0
    %v102 = vsel %vm91, %v67, 0
    %v105 = vsel %vm91, %v68, 0
    %v108 = vsel %vm91, %v69, 0
    %v111 = vsel %vm91, %v70, 0
    %v114 = vsel %vm91, %v71, 0
    %v117 = vsel %vm91, %v72, 0
    %v120 = vsel %vm91, %v73, 0
    %v123 = vsel %vm91, %v74, 0
    %v126 = vsel %vm91, %v75, 0
    %v129 = vsel %vm91, %v76, 0
    %v132 = vsel %vm91, %v77, 0
    %v135 = vsel %vm91, %v78, 0
    %v138 = vsel %vm91, %v79, 0
    %140 = vmatprep.subr.mxu0 0.0
    %141 = vmatpush1.msra.mxu0 %v80
    %142 = vmatprep.subr.mxu0 0.0
    %143 = vmatpush1.msra.mxu0 %v81
    %144 = vmatprep.subr.mxu0 0.0
    %145 = vmatpush1.msra.mxu0 %v82
    %146 = vmatprep.subr.mxu0 0.0
    %147 = vmatpush1.msra.mxu0 %v83
    %148 = vmatprep.subr.mxu0 0.0
    %149 = vmatpush1.msra.mxu0 0.0
    %150 = vmatprep.subr.mxu0 0.0
    %151 = vmatpush1.msra.mxu0 0.0
    %152 = vmatprep.subr.mxu0 0.0
    %153 = vmatpush1.msra.mxu0 0.0
    %154 = vmatprep.subr.mxu0 0.0
    %155 = vmatpush1.msra.mxu0 0.0
    %156 = vmatprep.subr.mxu0 0.0
    %157 = vmatpush1.msra.mxu0 0.0
    %158 = vmatprep.subr.mxu0 0.0
    %159 = vmatpush1.msra.mxu0 0.0
    %160 = vmatprep.subr.mxu0 0.0
    %161 = vmatpush1.msra.mxu0 0.0
    %162 = vmatprep.subr.mxu0 0.0
    %163 = vmatpush1.msra.mxu0 0.0
    %164 = vmatprep.subr.mxu0 0.0
    %165 = vmatpush1.msra.mxu0 0.0
    %166 = vmatprep.subr.mxu0 0.0
    %167 = vmatpush1.msra.mxu0 0.0
    %168 = vmatprep.subr.mxu0 0.0
    %169 = vmatpush1.msra.mxu0 0.0
    %170 = vmatprep.subr.mxu0 0.0
    %171 = vmatpush1.msra.mxu0 0.0
    %172 = vmatprep.subr.mxu0 0.0
    %173 = vmatpush1.msra.mxu0 0.0
    %174 = vmatprep.subr.mxu0 0.0
    %175 = vmatpush1.msra.mxu0 0.0
    %176 = vmatprep.subr.mxu0 0.0
    %177 = vmatpush1.msra.mxu0 0.0
    %178 = vmatprep.subr.mxu0 0.0
    %179 = vmatpush1.msra.mxu0 0.0
    %180 = vmatprep.subr.mxu0 0.0
    %181 = vmatpush1.msra.mxu0 0.0
    %182 = vmatprep.subr.mxu0 0.0
    %183 = vmatpush1.msra.mxu0 0.0
    %184 = vmatprep.subr.mxu0 0.0
    %185 = vmatpush1.msra.mxu0 0.0
    %186 = vmatprep.subr.mxu0 0.0
    %187 = vmatpush1.msra.mxu0 0.0
    %188 = vmatprep.subr.mxu0 0.0
    %189 = vmatpush1.msra.mxu0 0.0
    %190 = vmatprep.subr.mxu0 0.0
    %191 = vmatpush1.msra.mxu0 0.0
    %192 = vmatprep.subr.mxu0 0.0
    %193 = vmatpush1.msra.mxu0 0.0
    %194 = vmatprep.subr.mxu0 0.0
    %195 = vmatpush1.msra.mxu0 0.0
    %196 = vmatprep.subr.mxu0 0.0
    %197 = vmatpush1.msra.mxu0 0.0
    %198 = vmatprep.subr.mxu0 0.0
    %199 = vmatpush1.msra.mxu0 0.0
    %200 = vmatprep.subr.mxu0 0.0
    %201 = vmatpush1.msra.mxu0 0.0
    %202 = vmatprep.subr.mxu0 0.0
    %203 = vmatpush1.msra.mxu0 0.0
    %204 = vmatprep.mubr.f32.mxu0 0.0
    %205 = vmatmul.mubr.f32.gmra.mrb[0].mxu0 %v93
    %v206 = vpop.f32.mrb[0].mxu0
    %v207 = vadd.f32 %v89, %v206
    %v208 = vpop.f32.mrb[0].mxu0
    %209 = vmatprep.mubr.f32.mxu0 0.0
    %210 = vmatmul.mubr.f32.gmra.mrb[0].mxu0 %v96
    %v211 = vpop.f32.mrb[0].mxu0
    %v212 = vadd.f32 %v89, %v211
    %v213 = vpop.f32.mrb[0].mxu0
    %214 = vmatprep.mubr.f32.mxu0 0.0
    %215 = vmatmul.mubr.f32.gmra.mrb[0].mxu0 %v99
    %v216 = vpop.f32.mrb[0].mxu0
    %v217 = vadd.f32 %v89, %v216
    %v218 = vpop.f32.mrb[0].mxu0
    %219 = vmatprep.mubr.f32.mxu0 0.0
    %220 = vmatmul.mubr.f32.gmra.mrb[0].mxu0 %v102
    %v221 = vpop.f32.mrb[0].mxu0
    %v222 = vadd.f32 %v89, %v221
    %v223 = vpop.f32.mrb[0].mxu0
    %224 = vmatprep.mubr.f32.mxu0 0.0
    %225 = vmatmul.mubr.f32.gmra.mrb[0].mxu0 %v105
    %v226 = vpop.f32.mrb[0].mxu0
    %v227 = vadd.f32 %v89, %v226
    %v228 = vpop.f32.mrb[0].mxu0
    %229 = vmatprep.mubr.f32.mxu0 0.0
    %230 = vmatmul.mubr.f32.gmra.mrb[0].mxu0 %v108
    %v231 = vpop.f32.mrb[0].mxu0
    %v232 = vadd.f32 %v89, %v231
    %v233 = vpop.f32.mrb[0].mxu0
    %234 = vmatprep.mubr.f32.mxu0 0.0
    %235 = vmatmul.mubr.f32.gmra.mrb[0].mxu0 %v111
    %v236 = vpop.f32.mrb[0].mxu0
    %v237 = vadd.f32 %v89, %v236
    %v238 = vpop.f32.mrb[0].mxu0
    %239 = vmatprep.mubr.f32.mxu0 0.0
    %240 = vmatmul.mubr.f32.gmra.mrb[0].mxu0 %v114
    %v241 = vpop.f32.mrb[0].mxu0
    %v242 = vadd.f32 %v89, %v241
    %v243 = vpop.f32.mrb[0].mxu0
    %244 = vmatprep.mubr.f32.mxu0 0.0
    %245 = vmatmul.mubr.f32.gmra.mrb[0].mxu0 %v117
    %v246 = vpop.f32.mrb[0].mxu0
    %v247 = vadd.f32 %v89, %v246
    %v248 = vpop.f32.mrb[0].mxu0
    %249 = vmatprep.mubr.f32.mxu0 0.0
    %250 = vmatmul.mubr.f32.gmra.mrb[0].mxu0 %v120
    %v251 = vpop.f32.mrb[0].mxu0
    %v252 = vadd.f32 %v89, %v251
    %v253 = vpop.f32.mrb[0].mxu0
    %254 = vmatprep.mubr.f32.mxu0 0.0
    %255 = vmatmul.mubr.f32.gmra.mrb[0].mxu0 %v123
    %v256 = vpop.f32.mrb[0].mxu0
    %v257 = vadd.f32 %v89, %v256
    %v258 = vpop.f32.mrb[0].mxu0
    %259 = vmatprep.mubr.f32.mxu0 0.0
    %260 = vmatmul.mubr.f32.gmra.mrb[0].mxu0 %v126
    %v261 = vpop.f32.mrb[0].mxu0
    %v262 = vadd.f32 %v89, %v261
    %v263 = vpop.f32.mrb[0].mxu0
    %264 = vmatprep.mubr.f32.mxu0 0.0
    %265 = vmatmul.mubr.f32.gmra.mrb[0].mxu0 %v129
    %v266 = vpop.f32.mrb[0].mxu0
    %v267 = vadd.f32 %v89, %v266
    %v268 = vpop.f32.mrb[0].mxu0
    %269 = vmatprep.mubr.f32.mxu0 0.0
    %270 = vmatmul.mubr.f32.gmra.mrb[0].mxu0 %v132
    %v271 = vpop.f32.mrb[0].mxu0
    %v272 = vadd.f32 %v89, %v271
    %v273 = vpop.f32.mrb[0].mxu0
    %274 = vmatprep.mubr.f32.mxu0 0.0
    %275 = vmatmul.mubr.f32.gmra.mrb[0].mxu0 %v135
    %v276 = vpop.f32.mrb[0].mxu0
    %v277 = vadd.f32 %v89, %v276
    %v278 = vpop.f32.mrb[0].mxu0
    %279 = vmatprep.mubr.f32.mxu0 0.0
    %280 = vmatmul.mubr.f32.gmra.mrb[0].mxu0 %v138
    %v281 = vpop.f32.mrb[0].mxu0
    %v282 = vadd.f32 %v89, %v281
    %v283 = vpop.f32.mrb[0].mxu0
    %284 = vdwg.mxu0
    %v285 = vmax.f32 %v207, 0.0
    %v286 = vmax.f32 %v212, 0.0
    %v287 = vmax.f32 %v217, 0.0
    %v288 = vmax.f32 %v222, 0.0
    %v289 = vmax.f32 %v227, 0.0
    %v290 = vmax.f32 %v232, 0.0
    %v291 = vmax.f32 %v237, 0.0
    %v292 = vmax.f32 %v242, 0.0
    %v293 = vmax.f32 %v247, 0.0
    %v294 = vmax.f32 %v252, 0.0
    %v295 = vmax.f32 %v257, 0.0
    %v296 = vmax.f32 %v262, 0.0
    %v297 = vmax.f32 %v267, 0.0
    %v298 = vmax.f32 %v272, 0.0
    %v299 = vmax.f32 %v277, 0.0
    %v300 = vmax.f32 %v282, 0.0
    %v301 = vld [vmem:[%s4] sm:$0xff]
    %v302 = vld [vmem:[%s4 + $0x8] sm:$0xff]
    %v303 = vld [vmem:[%s4 + $0x10] sm:$0xff]
    %v304 = vld [vmem:[%s4 + $0x18] sm:$0xff]
    %v305 = vld [vmem:[%s5] sm:$0x1]
    %v307 = vlaneseq
    %v308 = vshrl.u32 %v307, 7
    %v309 = vsub.s32 0, %v308
    %v310 = vrot.slane %v305, %v309
    %v313 = vsel %vm91, %v285, 0
    %v316 = vsel %vm91, %v286, 0
    %v319 = vsel %vm91, %v287, 0
    %v322 = vsel %vm91, %v288, 0
    %v325 = vsel %vm91, %v289, 0
    %v328 = vsel %vm91, %v290, 0
    %v331 = vsel %vm91, %v291, 0
    %v334 = vsel %vm91, %v292, 0
    %v337 = vsel %vm91, %v293, 0
    %v340 = vsel %vm91, %v294, 0
    %v343 = vsel %vm91, %v295, 0
    %v346 = vsel %vm91, %v296, 0
    %v349 = vsel %vm91, %v297, 0
    %v352 = vsel %vm91, %v298, 0
    %v355 = vsel %vm91, %v299, 0
    %v358 = vsel %vm91, %v300, 0
    %360 = vmatprep.subr.mxu0 0.0
    %361 = vmatpush1.msra.mxu0 %v301
    %362 = vmatprep.subr.mxu0 0.0
    %363 = vmatpush1.msra.mxu0 %v302
    %364 = vmatprep.subr.mxu0 0.0
    %365 = vmatpush1.msra.mxu0 %v303
    %366 = vmatprep.subr.mxu0 0.0
    %367 = vmatpush1.msra.mxu0 %v304
    %368 = vmatprep.subr.mxu0 0.0
    %369 = vmatpush1.msra.mxu0 0.0
    %370 = vmatprep.subr.mxu0 0.0
    %371 = vmatpush1.msra.mxu0 0.0
    %372 = vmatprep.subr.mxu0 0.0
    %373 = vmatpush1.msra.mxu0 0.0
    %374 = vmatprep.subr.mxu0 0.0
    %375 = vmatpush1.msra.mxu0 0.0
    %376 = vmatprep.subr.mxu0 0.0
    %377 = vmatpush1.msra.mxu0 0.0
    %378 = vmatprep.subr.mxu0 0.0
    %379 = vmatpush1.msra.mxu0 0.0
    %380 = vmatprep.subr.mxu0 0.0
    %381 = vmatpush1.msra.mxu0 0.0
    %382 = vmatprep.subr.mxu0 0.0
    %383 = vmatpush1.msra.mxu0 0.0
    %384 = vmatprep.subr.mxu0 0.0
    %385 = vmatpush1.msra.mxu0 0.0
    %386 = vmatprep.subr.mxu0 0.0
    %387 = vmatpush1.msra.mxu0 0.0
    %388 = vmatprep.subr.mxu0 0.0
    %389 = vmatpush1.msra.mxu0 0.0
    %390 = vmatprep.subr.mxu0 0.0
    %391 = vmatpush1.msra.mxu0 0.0
    %392 = vmatprep.subr.mxu0 0.0
    %393 = vmatpush1.msra.mxu0 0.0
    %394 = vmatprep.subr.mxu0 0.0
    %395 = vmatpush1.msra.mxu0 0.0
    %396 = vmatprep.subr.mxu0 0.0
    %397 = vmatpush1.msra.mxu0 0.0
    %398 = vmatprep.subr.mxu0 0.0
    %399 = vmatpush1.msra.mxu0 0.0
    %400 = vmatprep.subr.mxu0 0.0
    %401 = vmatpush1.msra.mxu0 0.0
    %402 = vmatprep.subr.mxu0 0.0
    %403 = vmatpush1.msra.mxu0 0.0
    %404 = vmatprep.subr.mxu0 0.0
    %405 = vmatpush1.msra.mxu0 0.0
    %406 = vmatprep.subr.mxu0 0.0
    %407 = vmatpush1.msra.mxu0 0.0
    %408 = vmatprep.subr.mxu0 0.0
    %409 = vmatpush1.msra.mxu0 0.0
    %410 = vmatprep.subr.mxu0 0.0
    %411 = vmatpush1.msra.mxu0 0.0
    %412 = vmatprep.subr.mxu0 0.0
    %413 = vmatpush1.msra.mxu0 0.0
    %414 = vmatprep.subr.mxu0 0.0
    %415 = vmatpush1.msra.mxu0 0.0
    %416 = vmatprep.subr.mxu0 0.0
    %417 = vmatpush1.msra.mxu0 0.0
    %418 = vmatprep.subr.mxu0 0.0
    %419 = vmatpush1.msra.mxu0 0.0
    %420 = vmatprep.subr.mxu0 0.0
    %421 = vmatpush1.msra.mxu0 0.0
    %422 = vmatprep.subr.mxu0 0.0
    %423 = vmatpush1.msra.mxu0 0.0
    %424 = vmatprep.mubr.f32.mxu0 0.0
    %425 = vmatmul.mubr.f32.gmra.mrb[0].mxu0 %v313
    %v426 = vpop.f32.mrb[0].mxu0
    %v427 = vadd.f32 %v310, %v426
    %v428 = vpop.f32.mrb[0].mxu0
    %429 = vmatprep.mubr.f32.mxu0 0.0
    %430 = vmatmul.mubr.f32.gmra.mrb[0].mxu0 %v316
    %v431 = vpop.f32.mrb[0].mxu0
    %v432 = vadd.f32 %v310, %v431
    %v433 = vpop.f32.mrb[0].mxu0
    %434 = vmatprep.mubr.f32.mxu0 0.0
    %435 = vmatmul.mubr.f32.gmra.mrb[0].mxu0 %v319
    %v436 = vpop.f32.mrb[0].mxu0
    %v437 = vadd.f32 %v310, %v436
    %v438 = vpop.f32.mrb[0].mxu0
    %439 = vmatprep.mubr.f32.mxu0 0.0
    %440 = vmatmul.mubr.f32.gmra.mrb[0].mxu0 %v322
    %v441 = vpop.f32.mrb[0].mxu0
    %v442 = vadd.f32 %v310, %v441
    %v443 = vpop.f32.mrb[0].mxu0
    %444 = vmatprep.mubr.f32.mxu0 0.0
    %445 = vmatmul.mubr.f32.gmra.mrb[0].mxu0 %v325
    %v446 = vpop.f32.mrb[0].mxu0
    %v447 = vadd.f32 %v310, %v446
    %v448 = vpop.f32.mrb[0].mxu0
    %449 = vmatprep.mubr.f32.mxu0 0.0
    %450 = vmatmul.mubr.f32.gmra.mrb[0].mxu0 %v328
    %v451 = vpop.f32.mrb[0].mxu0
    %v452 = vadd.f32 %v310, %v451
    %v453 = vpop.f32.mrb[0].mxu0
    %454 = vmatprep.mubr.f32.mxu0 0.0
    %455 = vmatmul.mubr.f32.gmra.mrb[0].mxu0 %v331
    %v456 = vpop.f32.mrb[0].mxu0
    %v457 = vadd.f32 %v310, %v456
    %v458 = vpop.f32.mrb[0].mxu0
    %459 = vmatprep.mubr.f32.mxu0 0.0
    %460 = vmatmul.mubr.f32.gmra.mrb[0].mxu0 %v334
    %v461 = vpop.f32.mrb[0].mxu0
    %v462 = vadd.f32 %v310, %v461
    %v463 = vpop.f32.mrb[0].mxu0
    %464 = vmatprep.mubr.f32.mxu0 0.0
    %465 = vmatmul.mubr.f32.gmra.mrb[0].mxu0 %v337
    %v466 = vpop.f32.mrb[0].mxu0
    %v467 = vadd.f32 %v310, %v466
    %v468 = vpop.f32.mrb[0].mxu0
    %469 = vmatprep.mubr.f32.mxu0 0.0
    %470 = vmatmul.mubr.f32.gmra.mrb[0].mxu0 %v340
    %v471 = vpop.f32.mrb[0].mxu0
    %v472 = vadd.f32 %v310, %v471
    %v473 = vpop.f32.mrb[0].mxu0
    %474 = vmatprep.mubr.f32.mxu0 0.0
    %475 = vmatmul.mubr.f32.gmra.mrb[0].mxu0 %v343
    %v476 = vpop.f32.mrb[0].mxu0
    %v477 = vadd.f32 %v310, %v476
    %v478 = vpop.f32.mrb[0].mxu0
    %479 = vmatprep.mubr.f32.mxu0 0.0
    %480 = vmatmul.mubr.f32.gmra.mrb[0].mxu0 %v346
    %v481 = vpop.f32.mrb[0].mxu0
    %v482 = vadd.f32 %v310, %v481
    %v483 = vpop.f32.mrb[0].mxu0
    %484 = vmatprep.mubr.f32.mxu0 0.0
    %485 = vmatmul.mubr.f32.gmra.mrb[0].mxu0 %v349
    %v486 = vpop.f32.mrb[0].mxu0
    %v487 = vadd.f32 %v310, %v486
    %v488 = vpop.f32.mrb[0].mxu0
    %489 = vmatprep.mubr.f32.mxu0 0.0
    %490 = vmatmul.mubr.f32.gmra.mrb[0].mxu0 %v352
    %v491 = vpop.f32.mrb[0].mxu0
    %v492 = vadd.f32 %v310, %v491
    %v493 = vpop.f32.mrb[0].mxu0
    %494 = vmatprep.mubr.f32.mxu0 0.0
    %495 = vmatmul.mubr.f32.gmra.mrb[0].mxu0 %v355
    %v496 = vpop.f32.mrb[0].mxu0
    %v497 = vadd.f32 %v310, %v496
    %v498 = vpop.f32.mrb[0].mxu0
    %499 = vmatprep.mubr.f32.mxu0 0.0
    %500 = vmatmul.mubr.f32.gmra.mrb[0].mxu0 %v358
    %v501 = vpop.f32.mrb[0].mxu0
    %v502 = vadd.f32 %v310, %v501
    %v503 = vpop.f32.mrb[0].mxu0
    %504 = vdwg.mxu0
    %v505 = vmax.f32 %v427, 0.0
    %v506 = vmax.f32 %v432, 0.0
    %v507 = vmax.f32 %v437, 0.0
    %v508 = vmax.f32 %v442, 0.0
    %v509 = vmax.f32 %v447, 0.0
    %v510 = vmax.f32 %v452, 0.0
    %v511 = vmax.f32 %v457, 0.0
    %v512 = vmax.f32 %v462, 0.0
    %v513 = vmax.f32 %v467, 0.0
    %v514 = vmax.f32 %v472, 0.0
    %v515 = vmax.f32 %v477, 0.0
    %v516 = vmax.f32 %v482, 0.0
    %v517 = vmax.f32 %v487, 0.0
    %v518 = vmax.f32 %v492, 0.0
    %v519 = vmax.f32 %v497, 0.0
    %v520 = vmax.f32 %v502, 0.0
    %v521 = vld [vmem:[%s6] sm:$0x1]
    %v522 = vld [vmem:[#allocation2] sm:$0x1]
    %524 = vset.pattern.permute.xlu0 0
    %525 = vperm.xlu0 %524, %v522
    %v526 = vpop.permute.xlu0 %525
    %v528 = vlaneseq
    %v529 = vshrl.u32 %v528, 7
    %v530 = vsub.s32 0, %v529
    %v531 = vrot.slane %v526, %v530
    %v533 = vsel %vm91, %v521, 0
    %v536 = vsel %vm91, %v505, 0
    %v539 = vsel %vm91, %v506, 0
    %v542 = vsel %vm91, %v507, 0
    %v545 = vsel %vm91, %v508, 0
    %v548 = vsel %vm91, %v509, 0
    %v551 = vsel %vm91, %v510, 0
    %v554 = vsel %vm91, %v511, 0
    %v557 = vsel %vm91, %v512, 0
    %v560 = vsel %vm91, %v513, 0
    %v563 = vsel %vm91, %v514, 0
    %v566 = vsel %vm91, %v515, 0
    %v569 = vsel %vm91, %v516, 0
    %v572 = vsel %vm91, %v517, 0
    %v575 = vsel %vm91, %v518, 0
    %v578 = vsel %vm91, %v519, 0
    %v581 = vsel %vm91, %v520, 0
    %583 = vmatprep.subr.mxu0 0.0
    %584 = vmatpush1.xpose.msra.mxu0 %v536
    %585 = vmatprep.subr.mxu0 0.0
    %586 = vmatpush1.xpose.msra.mxu0 %v539
    %587 = vmatprep.subr.mxu0 0.0
    %588 = vmatpush1.xpose.msra.mxu0 %v542
    %589 = vmatprep.subr.mxu0 0.0
    %590 = vmatpush1.xpose.msra.mxu0 %v545
    %591 = vmatprep.subr.mxu0 0.0
    %592 = vmatpush1.xpose.msra.mxu0 %v548
    %593 = vmatprep.subr.mxu0 0.0
    %594 = vmatpush1.xpose.msra.mxu0 %v551
    %595 = vmatprep.subr.mxu0 0.0
    %596 = vmatpush1.xpose.msra.mxu0 %v554
    %597 = vmatprep.subr.mxu0 0.0
    %598 = vmatpush1.xpose.msra.mxu0 %v557
    %599 = vmatprep.subr.mxu0 0.0
    %600 = vmatpush1.xpose.msra.mxu0 %v560
    %601 = vmatprep.subr.mxu0 0.0
    %602 = vmatpush1.xpose.msra.mxu0 %v563
    %603 = vmatprep.subr.mxu0 0.0
    %604 = vmatpush1.xpose.msra.mxu0 %v566
    %605 = vmatprep.subr.mxu0 0.0
    %606 = vmatpush1.xpose.msra.mxu0 %v569
    %607 = vmatprep.subr.mxu0 0.0
    %608 = vmatpush1.xpose.msra.mxu0 %v572
    %609 = vmatprep.subr.mxu0 0.0
    %610 = vmatpush1.xpose.msra.mxu0 %v575
    %611 = vmatprep.subr.mxu0 0.0
    %612 = vmatpush1.xpose.msra.mxu0 %v578
    %613 = vmatprep.subr.mxu0 0.0
    %614 = vmatpush1.xpose.msra.mxu0 %v581
    %615 = vmatprep.subr.mxu0 0.0
    %616 = vmatpush1.xpose.msra.mxu0 0.0
    %617 = vmatprep.subr.mxu0 0.0
    %618 = vmatpush1.xpose.msra.mxu0 0.0
    %619 = vmatprep.subr.mxu0 0.0
    %620 = vmatpush1.xpose.msra.mxu0 0.0
    %621 = vmatprep.subr.mxu0 0.0
    %622 = vmatpush1.xpose.msra.mxu0 0.0
    %623 = vmatprep.subr.mxu0 0.0
    %624 = vmatpush1.xpose.msra.mxu0 0.0
    %625 = vmatprep.subr.mxu0 0.0
    %626 = vmatpush1.xpose.msra.mxu0 0.0
    %627 = vmatprep.subr.mxu0 0.0
    %628 = vmatpush1.xpose.msra.mxu0 0.0
    %629 = vmatprep.subr.mxu0 0.0
    %630 = vmatpush1.xpose.msra.mxu0 0.0
    %631 = vmatprep.subr.mxu0 0.0
    %632 = vmatpush1.xpose.msra.mxu0 0.0
    %633 = vmatprep.subr.mxu0 0.0
    %634 = vmatpush1.xpose.msra.mxu0 0.0
    %635 = vmatprep.subr.mxu0 0.0
    %636 = vmatpush1.xpose.msra.mxu0 0.0
    %637 = vmatprep.subr.mxu0 0.0
    %638 = vmatpush1.xpose.msra.mxu0 0.0
    %639 = vmatprep.subr.mxu0 0.0
    %640 = vmatpush1.xpose.msra.mxu0 0.0
    %641 = vmatprep.subr.mxu0 0.0
    %642 = vmatpush1.xpose.msra.mxu0 0.0
    %643 = vmatprep.subr.mxu0 0.0
    %644 = vmatpush1.xpose.msra.mxu0 0.0
    %645 = vmatprep.subr.mxu0 0.0
    %646 = vmatpush1.xpose.msra.mxu0 0.0
    %647 = vmatprep.mubr.f32.mxu0 0.0
    %648 = vmatmul.mubr.f32.gmra.mrb[0].mxu0 %v533
    %v649 = vpop.f32.mrb[0].mxu0
    %v650 = vadd.f32 %v531, %v649
    %v651 = vpop.f32.mrb[0].mxu0
    %652 = vdwg.mxu0
    %v653 = vsub.f32 0.0, %v650
    %v654 = vmul.f32 %v653, 1.442695
    %v655 = vpow.pop %v654
    %v656 = vadd.f32 %v655, 1.0
    %v657 = vrcp.pop %v656
    %v658 = vmul.f32 1.0, %v657
    %659 = vst [vmem:[#allocation3] sm:$0x1] %v658
    // Predicated region
    $region34: #{tpu_custom_call.1} parent=1 // pred_check
      _
    $region35: #{tpu_custom_call.1} parent=1 // pred_check_branch
      %661 = sbr.rel (0) target = $region37
    $region36: #{tpu_custom_call.1} parent=1 // pred_region
      %s663 = ssub.s32 16, 16
      %664 = vsyncadd [#allocation4], %s663
      %s666 = sshll.u32 [#allocation3], 4
      %s667 = int_to_ptr.vmem [resolvable:$true] %s666
      %669 = dma.vmem_to_hbm [thread:$0]  %s667, 16, %s8, [#allocation4]
    $region37: #{tpu_custom_call.1} parent=1 // pred_fallthru
      _
    // Predicated region
    $region38: #{tpu_custom_call.1} parent=1 // pred_check
      _
    $region39: #{tpu_custom_call.1} parent=1 // pred_check_branch
      %671 = sbr.rel (0) target = $region41
    $region40: #{tpu_custom_call.1} parent=1 // pred_region
      %672 = dma.done [#allocation4], 16
    $region41: #{tpu_custom_call.1} parent=1 // pred_fallthru
      _
    %673 = vsyncpa [#allocation4], 1

</llo_original>
